<compile_context>
chip_gen: v5e
topology: v5e:2x2
jax: 0.10.0
libtpu: 0.0.40
codegen_flags: <defaults>
</compile_context>

<pallas_src>
import functools

import jax
import jax.numpy as jnp
from jax.experimental import pallas as pl
from jax.experimental.pallas import tpu as pltpu


def _round_up(n, m):
    return ((n + m - 1) // m) * m


def mlp_kernel(w1_ref, b1_ref, w2_ref, b2_ref, x_ref, o_ref):
    """x_ref: (2, TS, TL) VMEM -- feature axis leading, batch dense over (TS, TL).
    w1_ref (2,8), b1_ref (8,), w2_ref (8,), b2_ref (1,) are whole-array SMEM scalars.
    o_ref: (TS, TL) VMEM."""
    hidden = w1_ref.shape[1]  # 8

    x0 = x_ref[0]  # (TS, TL) f32, dense vregs
    x1 = x_ref[1]  # (TS, TL) f32

    # Per hidden unit j: t_j = relu(x0*W1[0,j] + x1*W1[1,j] + b1[j]) * w2[j]
    # (pure VPU broadcast-FMA; b1 folded into the accumulate).
    terms = []
    for j in range(hidden):
        h = x0 * w1_ref[0, j] + (x1 * w1_ref[1, j] + b1_ref[j])
        terms.append(jnp.maximum(h, 0.0) * w2_ref[j])

    # Tree-reduce the 8 terms (3 levels instead of an 8-deep serial chain).
    while len(terms) > 1:
        nxt = [terms[i] + terms[i + 1] for i in range(0, len(terms) - 1, 2)]
        if len(terms) % 2:
            nxt.append(terms[-1])
        terms = nxt

    o_ref[...] = (terms[0] + b2_ref[0]).astype(o_ref.dtype)


@functools.partial(jax.jit, static_argnames=("tl", "ts"))
def my_neural_net(x, w1, b1, w2, b2, *, tl=512, ts=512):
    """Forward pass of MyNeuralNet.

    x:  (B, 2) f32 (PyTorch layout)
    w1: (2, 8)  (= PyTorch Linear(2,8).weight.T)
    b1: (8,)
    w2: (8,)    (= PyTorch Linear(8,1).weight flattened)
    b2: (1,)
    returns (B, 1) f32

    tl: lane width of a tile (multiple of 128), ts: sublane rows per tile
    (multiple of 8).  One grid step processes ts*tl batch elements.
    """
    B = x.shape[0]
    x = jnp.asarray(x, jnp.float32)

    tile = ts * tl
    if B >= tile:
        Bp = _round_up(B, tile)
        ts_eff = ts
    else:
        # Small batch: single grid step, pad only to the minimal dense tile.
        Bp = _round_up(B, 8 * tl)
        ts_eff = Bp // tl
    R = Bp // tl

    # pad + transpose + reshape: one fused relayout pass under jit.
    xp = jnp.pad(x, ((0, Bp - B), (0, 0)))      # (Bp, 2)
    xt = xp.T.reshape(2, R, tl)                 # (2, R, TL): batch fills sublanes+lanes

    grid = (R // ts_eff,)

    out = pl.pallas_call(
        mlp_kernel,
        out_shape=jax.ShapeDtypeStruct((R, tl), jnp.float32),
        grid=grid,
        in_specs=[
            # Tiny params: whole arrays resident in SMEM, read as scalars.
            pl.BlockSpec(memory_space=pltpu.MemorySpace.SMEM),  # w1 (2, 8)
            pl.BlockSpec(memory_space=pltpu.MemorySpace.SMEM),  # b1 (8,)
            pl.BlockSpec(memory_space=pltpu.MemorySpace.SMEM),  # w2 (8,)
            pl.BlockSpec(memory_space=pltpu.MemorySpace.SMEM),  # b2 (1,)
            # Dense, lane+sublane-filled input tile.
            pl.BlockSpec((2, ts_eff, tl), lambda i: (0, i, 0)),
        ],
        out_specs=pl.BlockSpec((ts_eff, tl), lambda i: (i, 0)),
        compiler_params=pltpu.CompilerParams(
            dimension_semantics=("parallel",),
        ),
    )(w1, b1, w2, b2, xt)

    # out[r, l] = y[r*tl + l]; padded lanes hold relu(b1)@w2 + b2 and are sliced off.
    return out.reshape(Bp)[:B].reshape(B, 1)


def init_params(key):
    """Deterministic init matching PyTorch nn.Linear defaults (shapes adapted).

    nn.Linear(2, 8): weight (8,2), bias (8,) -> stored here as w1 (2,8), b1 (8,)
    nn.Linear(8, 1): weight (1,8), bias (1,) -> stored here as w2 (8,),  b2 (1,)
    """
    k1, k2, k3, k4 = jax.random.split(key, 4)
    bound1 = 1.0 / jnp.sqrt(2.0)
    bound2 = 1.0 / jnp.sqrt(8.0)
    w1 = jax.random.uniform(k1, (2, 8), jnp.float32, -bound1, bound1)
    b1 = jax.random.uniform(k2, (8,), jnp.float32, -bound1, bound1)
    w2 = jax.random.uniform(k3, (8,), jnp.float32, -bound2, bound2)
    b2 = jax.random.uniform(k4, (1,), jnp.float32, -bound2, bound2)
    return w1, b1, w2, b2


def _reference(x, w1, b1, w2, b2):
    h = jnp.maximum(x @ w1 + b1[None, :], 0.0)
    return h @ w2[:, None] + b2[0]


if __name__ == "__main__":
    key = jax.random.PRNGKey(0)
    w1, b1, w2, b2 = init_params(key)

    # Same data as the original script: x = [[1,2],[3,4],[5,6],[7,8]]
    x = jnp.array([[1.0, 2.0], [3.0, 4.0], [5.0, 6.0], [7.0, 8.0]], dtype=jnp.float32)

    out = jax.block_until_ready(my_neural_net(x, w1, b1, w2, b2))
    ref = _reference(x, w1, b1, w2, b2)
    assert out.shape == (4, 1)
    assert jnp.allclose(out, ref, atol=1e-5), (out, ref)

    # Secondary check exercising multiple grid steps + ragged-batch padding.
    xb = jax.random.normal(jax.random.PRNGKey(1), (5000, 2), jnp.float32)
    out_b = jax.block_until_ready(my_neural_net(xb, w1, b1, w2, b2, tl=128, ts=8))
    ref_b = _reference(xb, w1, b1, w2, b2)
    assert out_b.shape == (5000, 1)
    assert jnp.allclose(out_b, ref_b, atol=1e-4), "grid path mismatch"

    print("KERNEL_OK")
</pallas_src>

<mosaic_0001>
module attributes {stable_mosaic.version = 11 : i64} {
  func.func @mlp_kernel(%arg0: i32, %arg1: memref<2x8xf32, #tpu.memory_space<smem>>, %arg2: memref<8xf32, #tpu.memory_space<smem>>, %arg3: memref<8xf32, #tpu.memory_space<smem>>, %arg4: memref<1xf32, #tpu.memory_space<smem>>, %arg5: memref<2x8x512xf32, #tpu.memory_space<vmem>>, %arg6: memref<8x512xf32, #tpu.memory_space<vmem>>) attributes {dimension_semantics = [#tpu.dimension_semantics<parallel>], iteration_bounds = array<i64: 1>, scalar_prefetch = 0 : i64, scratch_operands = 0 : i64, tpu.core_type = #tpu.core_type<tc>, window_params = [{transform_indices = @transform_0, window_bounds = array<i64: 2, 8>}, {transform_indices = @transform_1, window_bounds = array<i64: 8>}, {transform_indices = @transform_2, window_bounds = array<i64: 8>}, {transform_indices = @transform_3, window_bounds = array<i64: 1>}, {transform_indices = @transform_4, window_bounds = array<i64: 2, 8, 512>}, {transform_indices = @transform_5, window_bounds = array<i64: 8, 512>}]} {
    %c0 = arith.constant 0 : index
    %c0_0 = arith.constant 0 : index
    %c0_1 = arith.constant 0 : index
    %0 = vector.load %arg5[%c0, %c0_0, %c0_1] : memref<2x8x512xf32, #tpu.memory_space<vmem>>, vector<1x8x512xf32>
    %1 = vector.shape_cast %0 : vector<1x8x512xf32> to vector<8x512xf32>
    %c1 = arith.constant 1 : index
    %c0_2 = arith.constant 0 : index
    %c0_3 = arith.constant 0 : index
    %2 = vector.load %arg5[%c1, %c0_2, %c0_3] : memref<2x8x512xf32, #tpu.memory_space<vmem>>, vector<1x8x512xf32>
    %3 = vector.shape_cast %2 : vector<1x8x512xf32> to vector<8x512xf32>
    %c0_4 = arith.constant 0 : index
    %c0_5 = arith.constant 0 : index
    %4 = memref.load %arg1[%c0_4, %c0_5] : memref<2x8xf32, #tpu.memory_space<smem>>
    %5 = vector.broadcast %4 : f32 to vector<8x512xf32>
    %6 = arith.mulf %1, %5 : vector<8x512xf32>
    %c1_6 = arith.constant 1 : index
    %c0_7 = arith.constant 0 : index
    %7 = memref.load %arg1[%c1_6, %c0_7] : memref<2x8xf32, #tpu.memory_space<smem>>
    %8 = vector.broadcast %7 : f32 to vector<8x512xf32>
    %9 = arith.mulf %3, %8 : vector<8x512xf32>
    %c0_8 = arith.constant 0 : index
    %10 = memref.load %arg2[%c0_8] : memref<8xf32, #tpu.memory_space<smem>>
    %11 = vector.broadcast %10 : f32 to vector<8x512xf32>
    %12 = arith.addf %9, %11 : vector<8x512xf32>
    %13 = arith.addf %6, %12 : vector<8x512xf32>
    %cst = arith.constant 0.000000e+00 : f32
    %14 = vector.broadcast %cst : f32 to vector<8x512xf32>
    %15 = arith.maximumf %13, %14 : vector<8x512xf32>
    %c0_9 = arith.constant 0 : index
    %16 = memref.load %arg3[%c0_9] : memref<8xf32, #tpu.memory_space<smem>>
    %17 = vector.broadcast %16 : f32 to vector<8x512xf32>
    %18 = arith.mulf %15, %17 : vector<8x512xf32>
    %c0_10 = arith.constant 0 : index
    %c1_11 = arith.constant 1 : index
    %19 = memref.load %arg1[%c0_10, %c1_11] : memref<2x8xf32, #tpu.memory_space<smem>>
    %20 = vector.broadcast %19 : f32 to vector<8x512xf32>
    %21 = arith.mulf %1, %20 : vector<8x512xf32>
    %c1_12 = arith.constant 1 : index
    %c1_13 = arith.constant 1 : index
    %22 = memref.load %arg1[%c1_12, %c1_13] : memref<2x8xf32, #tpu.memory_space<smem>>
    %23 = vector.broadcast %22 : f32 to vector<8x512xf32>
    %24 = arith.mulf %3, %23 : vector<8x512xf32>
    %c1_14 = arith.constant 1 : index
    %25 = memref.load %arg2[%c1_14] : memref<8xf32, #tpu.memory_space<smem>>
    %26 = vector.broadcast %25 : f32 to vector<8x512xf32>
    %27 = arith.addf %24, %26 : vector<8x512xf32>
    %28 = arith.addf %21, %27 : vector<8x512xf32>
    %cst_15 = arith.constant 0.000000e+00 : f32
    %29 = vector.broadcast %cst_15 : f32 to vector<8x512xf32>
    %30 = arith.maximumf %28, %29 : vector<8x512xf32>
    %c1_16 = arith.constant 1 : index
    %31 = memref.load %arg3[%c1_16] : memref<8xf32, #tpu.memory_space<smem>>
    %32 = vector.broadcast %31 : f32 to vector<8x512xf32>
    %33 = arith.mulf %30, %32 : vector<8x512xf32>
    %c0_17 = arith.constant 0 : index
    %c2 = arith.constant 2 : index
    %34 = memref.load %arg1[%c0_17, %c2] : memref<2x8xf32, #tpu.memory_space<smem>>
    %35 = vector.broadcast %34 : f32 to vector<8x512xf32>
    %36 = arith.mulf %1, %35 : vector<8x512xf32>
    %c1_18 = arith.constant 1 : index
    %c2_19 = arith.constant 2 : index
    %37 = memref.load %arg1[%c1_18, %c2_19] : memref<2x8xf32, #tpu.memory_space<smem>>
    %38 = vector.broadcast %37 : f32 to vector<8x512xf32>
    %39 = arith.mulf %3, %38 : vector<8x512xf32>
    %c2_20 = arith.constant 2 : index
    %40 = memref.load %arg2[%c2_20] : memref<8xf32, #tpu.memory_space<smem>>
    %41 = vector.broadcast %40 : f32 to vector<8x512xf32>
    %42 = arith.addf %39, %41 : vector<8x512xf32>
    %43 = arith.addf %36, %42 : vector<8x512xf32>
    %cst_21 = arith.constant 0.000000e+00 : f32
    %44 = vector.broadcast %cst_21 : f32 to vector<8x512xf32>
    %45 = arith.maximumf %43, %44 : vector<8x512xf32>
    %c2_22 = arith.constant 2 : index
    %46 = memref.load %arg3[%c2_22] : memref<8xf32, #tpu.memory_space<smem>>
    %47 = vector.broadcast %46 : f32 to vector<8x512xf32>
    %48 = arith.mulf %45, %47 : vector<8x512xf32>
    %c0_23 = arith.constant 0 : index
    %c3 = arith.constant 3 : index
    %49 = memref.load %arg1[%c0_23, %c3] : memref<2x8xf32, #tpu.memory_space<smem>>
    %50 = vector.broadcast %49 : f32 to vector<8x512xf32>
    %51 = arith.mulf %1, %50 : vector<8x512xf32>
    %c1_24 = arith.constant 1 : index
    %c3_25 = arith.constant 3 : index
    %52 = memref.load %arg1[%c1_24, %c3_25] : memref<2x8xf32, #tpu.memory_space<smem>>
    %53 = vector.broadcast %52 : f32 to vector<8x512xf32>
    %54 = arith.mulf %3, %53 : vector<8x512xf32>
    %c3_26 = arith.constant 3 : index
    %55 = memref.load %arg2[%c3_26] : memref<8xf32, #tpu.memory_space<smem>>
    %56 = vector.broadcast %55 : f32 to vector<8x512xf32>
    %57 = arith.addf %54, %56 : vector<8x512xf32>
    %58 = arith.addf %51, %57 : vector<8x512xf32>
    %cst_27 = arith.constant 0.000000e+00 : f32
    %59 = vector.broadcast %cst_27 : f32 to vector<8x512xf32>
    %60 = arith.maximumf %58, %59 : vector<8x512xf32>
    %c3_28 = arith.constant 3 : index
    %61 = memref.load %arg3[%c3_28] : memref<8xf32, #tpu.memory_space<smem>>
    %62 = vector.broadcast %61 : f32 to vector<8x512xf32>
    %63 = arith.mulf %60, %62 : vector<8x512xf32>
    %c0_29 = arith.constant 0 : index
    %c4 = arith.constant 4 : index
    %64 = memref.load %arg1[%c0_29, %c4] : memref<2x8xf32, #tpu.memory_space<smem>>
    %65 = vector.broadcast %64 : f32 to vector<8x512xf32>
    %66 = arith.mulf %1, %65 : vector<8x512xf32>
    %c1_30 = arith.constant 1 : index
    %c4_31 = arith.constant 4 : index
    %67 = memref.load %arg1[%c1_30, %c4_31] : memref<2x8xf32, #tpu.memory_space<smem>>
    %68 = vector.broadcast %67 : f32 to vector<8x512xf32>
    %69 = arith.mulf %3, %68 : vector<8x512xf32>
    %c4_32 = arith.constant 4 : index
    %70 = memref.load %arg2[%c4_32] : memref<8xf32, #tpu.memory_space<smem>>
    %71 = vector.broadcast %70 : f32 to vector<8x512xf32>
    %72 = arith.addf %69, %71 : vector<8x512xf32>
    %73 = arith.addf %66, %72 : vector<8x512xf32>
    %cst_33 = arith.constant 0.000000e+00 : f32
    %74 = vector.broadcast %cst_33 : f32 to vector<8x512xf32>
    %75 = arith.maximumf %73, %74 : vector<8x512xf32>
    %c4_34 = arith.constant 4 : index
    %76 = memref.load %arg3[%c4_34] : memref<8xf32, #tpu.memory_space<smem>>
    %77 = vector.broadcast %76 : f32 to vector<8x512xf32>
    %78 = arith.mulf %75, %77 : vector<8x512xf32>
    %c0_35 = arith.constant 0 : index
    %c5 = arith.constant 5 : index
    %79 = memref.load %arg1[%c0_35, %c5] : memref<2x8xf32, #tpu.memory_space<smem>>
    %80 = vector.broadcast %79 : f32 to vector<8x512xf32>
    %81 = arith.mulf %1, %80 : vector<8x512xf32>
    %c1_36 = arith.constant 1 : index
    %c5_37 = arith.constant 5 : index
    %82 = memref.load %arg1[%c1_36, %c5_37] : memref<2x8xf32, #tpu.memory_space<smem>>
    %83 = vector.broadcast %82 : f32 to vector<8x512xf32>
    %84 = arith.mulf %3, %83 : vector<8x512xf32>
    %c5_38 = arith.constant 5 : index
    %85 = memref.load %arg2[%c5_38] : memref<8xf32, #tpu.memory_space<smem>>
    %86 = vector.broadcast %85 : f32 to vector<8x512xf32>
    %87 = arith.addf %84, %86 : vector<8x512xf32>
    %88 = arith.addf %81, %87 : vector<8x512xf32>
    %cst_39 = arith.constant 0.000000e+00 : f32
    %89 = vector.broadcast %cst_39 : f32 to vector<8x512xf32>
    %90 = arith.maximumf %88, %89 : vector<8x512xf32>
    %c5_40 = arith.constant 5 : index
    %91 = memref.load %arg3[%c5_40] : memref<8xf32, #tpu.memory_space<smem>>
    %92 = vector.broadcast %91 : f32 to vector<8x512xf32>
    %93 = arith.mulf %90, %92 : vector<8x512xf32>
    %c0_41 = arith.constant 0 : index
    %c6 = arith.constant 6 : index
    %94 = memref.load %arg1[%c0_41, %c6] : memref<2x8xf32, #tpu.memory_space<smem>>
    %95 = vector.broadcast %94 : f32 to vector<8x512xf32>
    %96 = arith.mulf %1, %95 : vector<8x512xf32>
    %c1_42 = arith.constant 1 : index
    %c6_43 = arith.constant 6 : index
    %97 = memref.load %arg1[%c1_42, %c6_43] : memref<2x8xf32, #tpu.memory_space<smem>>
    %98 = vector.broadcast %97 : f32 to vector<8x512xf32>
    %99 = arith.mulf %3, %98 : vector<8x512xf32>
    %c6_44 = arith.constant 6 : index
    %100 = memref.load %arg2[%c6_44] : memref<8xf32, #tpu.memory_space<smem>>
    %101 = vector.broadcast %100 : f32 to vector<8x512xf32>
    %102 = arith.addf %99, %101 : vector<8x512xf32>
    %103 = arith.addf %96, %102 : vector<8x512xf32>
    %cst_45 = arith.constant 0.000000e+00 : f32
    %104 = vector.broadcast %cst_45 : f32 to vector<8x512xf32>
    %105 = arith.maximumf %103, %104 : vector<8x512xf32>
    %c6_46 = arith.constant 6 : index
    %106 = memref.load %arg3[%c6_46] : memref<8xf32, #tpu.memory_space<smem>>
    %107 = vector.broadcast %106 : f32 to vector<8x512xf32>
    %108 = arith.mulf %105, %107 : vector<8x512xf32>
    %c0_47 = arith.constant 0 : index
    %c7 = arith.constant 7 : index
    %109 = memref.load %arg1[%c0_47, %c7] : memref<2x8xf32, #tpu.memory_space<smem>>
    %110 = vector.broadcast %109 : f32 to vector<8x512xf32>
    %111 = arith.mulf %1, %110 : vector<8x512xf32>
    %c1_48 = arith.constant 1 : index
    %c7_49 = arith.constant 7 : index
    %112 = memref.load %arg1[%c1_48, %c7_49] : memref<2x8xf32, #tpu.memory_space<smem>>
    %113 = vector.broadcast %112 : f32 to vector<8x512xf32>
    %114 = arith.mulf %3, %113 : vector<8x512xf32>
    %c7_50 = arith.constant 7 : index
    %115 = memref.load %arg2[%c7_50] : memref<8xf32, #tpu.memory_space<smem>>
    %116 = vector.broadcast %115 : f32 to vector<8x512xf32>
    %117 = arith.addf %114, %116 : vector<8x512xf32>
    %118 = arith.addf %111, %117 : vector<8x512xf32>
    %cst_51 = arith.constant 0.000000e+00 : f32
    %119 = vector.broadcast %cst_51 : f32 to vector<8x512xf32>
    %120 = arith.maximumf %118, %119 : vector<8x512xf32>
    %c7_52 = arith.constant 7 : index
    %121 = memref.load %arg3[%c7_52] : memref<8xf32, #tpu.memory_space<smem>>
    %122 = vector.broadcast %121 : f32 to vector<8x512xf32>
    %123 = arith.mulf %120, %122 : vector<8x512xf32>
    %124 = arith.addf %18, %33 : vector<8x512xf32>
    %125 = arith.addf %48, %63 : vector<8x512xf32>
    %126 = arith.addf %78, %93 : vector<8x512xf32>
    %127 = arith.addf %108, %123 : vector<8x512xf32>
    %128 = arith.addf %124, %125 : vector<8x512xf32>
    %129 = arith.addf %126, %127 : vector<8x512xf32>
    %130 = arith.addf %128, %129 : vector<8x512xf32>
    %c0_53 = arith.constant 0 : index
    %131 = memref.load %arg4[%c0_53] : memref<1xf32, #tpu.memory_space<smem>>
    %132 = vector.broadcast %131 : f32 to vector<8x512xf32>
    %133 = arith.addf %130, %132 : vector<8x512xf32>
    %c0_54 = arith.constant 0 : index
    %c0_55 = arith.constant 0 : index
    %134 = vector.load %arg6[%c0_54, %c0_55] : memref<8x512xf32, #tpu.memory_space<vmem>>, vector<8x512xf32>
    tpu.vector_store %arg6[%c0_54, %c0_55], %133 {strides = array<i32>} : memref<8x512xf32, #tpu.memory_space<vmem>>, vector<8x512xf32>,
    return
  }
  func.func @transform_0(%arg0: i32) -> (i32, i32) {
    %c0_i32 = arith.constant 0 : i32
    %c0_i32_0 = arith.constant 0 : i32
    %c0_i32_1 = arith.constant 0 : i32
    return %c0_i32, %c0_i32_0 : i32, i32
  }
  func.func @transform_1(%arg0: i32) -> i32 {
    %c0_i32 = arith.constant 0 : i32
    %c0_i32_0 = arith.constant 0 : i32
    return %c0_i32 : i32
  }
  func.func @transform_2(%arg0: i32) -> i32 {
    %c0_i32 = arith.constant 0 : i32
    %c0_i32_0 = arith.constant 0 : i32
    return %c0_i32 : i32
  }
  func.func @transform_3(%arg0: i32) -> i32 {
    %c0_i32 = arith.constant 0 : i32
    %c0_i32_0 = arith.constant 0 : i32
    return %c0_i32 : i32
  }
  func.func @transform_4(%arg0: i32) -> (i32, i32, i32) {
    %c0_i32 = arith.constant 0 : i32
    %c0_i32_0 = arith.constant 0 : i32
    %c0_i32_1 = arith.constant 0 : i32
    return %c0_i32, %arg0, %c0_i32_0 : i32, i32, i32
  }
  func.func @transform_5(%arg0: i32) -> (i32, i32) {
    %c0_i32 = arith.constant 0 : i32
    %c0_i32_0 = arith.constant 0 : i32
    return %arg0, %c0_i32 : i32, i32
  }
}

</mosaic_0001>

<llo_original>
// kernel: my_neural_net.1
$region0: #{my_neural_net.1}
  #allocation0 [shape = 'u32[]', space=smem, size = 0x4, offset = 0x4, fixed_abs, tag = 'smem constant byte address 0x4 - core index']
  #allocation1 [shape = 'u32[72,128]{1,0:T(1,128)}', space=vmem, size = 0x9000, scoped, tag = 'internal scratch']
  #allocation2 [shape = 'f32[1]{0:T(128)S(6)}', space=smem, size = 0x200, scoped, tag = 'scoped memory for my_neural_net.1']
  %s0 = inlined_call_operand.vmem [shape: f32[2,8], index: 0, kind: input, shape index: {}]
  %s1 = inlined_call_operand.vmem [shape: f32[8], index: 1, kind: input, shape index: {}]
  %s2 = inlined_call_operand.vmem [shape: f32[8], index: 2, kind: input, shape index: {}]
  %s3 = inlined_call_operand.<no memory space> [shape: f32[1], index: 3, kind: input, shape index: {}]
  %s4 = inlined_call_operand.vmem [shape: f32[2,8,512], index: 4, kind: input, shape index: {}]
  %s5 = inlined_call_operand.vmem [shape: f32[8,512], index: 5, kind: output, shape index: {}]
  %s6 = sld [smem:[#allocation0]]
  $region42: #{my_neural_net.1} parent=0
    _
  %s8 = ssub.s32 1, %s6
  %s9 = scalar_select 0, %s8, %s6
  %10 = sst [smem:[#allocation2]] %s3
  $region1: #{my_neural_net.1} parent=0
    #allocation3 [shape = 'u8[1024]{0}', space=smem, size = 0x400, scoped, tag = 'input window, operand 0, single buffered']
    #allocation4 [shape = 's32[1]{0}', space=sflag, size = 0x4, scoped, tag = 'scoped memory for my_neural_net.1']
    #allocation5 [shape = 'u8[512]{0}', space=smem, size = 0x200, scoped, tag = 'input window, operand 1, single buffered']
    #allocation6 [shape = 's32[1]{0}', space=sflag, size = 0x4, scoped, tag = 'scoped memory for my_neural_net.1']
    #allocation7 [shape = 'u8[512]{0}', space=smem, size = 0x200, scoped, tag = 'input window, operand 2, single buffered']
    %11 = vsyncpa [#allocation4], 0
    %12 = vsyncpa [#allocation6], 0
    // Predicated region
    $region2: #{my_neural_net.1} parent=1 // pred_check
      _
    $region3: #{my_neural_net.1} parent=1 // pred_check_branch
      %14 = sbr.rel (0) target = $region5
    $region4: #{my_neural_net.1} parent=1 // pred_region
      %16 = vsyncadd [#allocation4], 0
      %s18 = sshll.u32 %s0, 4
      %s19 = int_to_ptr.vmem [resolvable:$true] %s18
      %21 = dma.vmem_to_smem %s19, 32, [#allocation3], [#allocation4]
    $region5: #{my_neural_net.1} parent=1 // pred_fallthru
      _
    // Predicated region
    $region6: #{my_neural_net.1} parent=1 // pred_check
      _
    $region7: #{my_neural_net.1} parent=1 // pred_check_branch
      %23 = sbr.rel (0) target = $region9
    $region8: #{my_neural_net.1} parent=1 // pred_region
      %25 = vsyncadd [#allocation6], 0
      %s27 = sshll.u32 %s1, 4
      %s28 = int_to_ptr.vmem [resolvable:$true] %s27
      %30 = dma.vmem_to_smem %s28, 16, [#allocation5], [#allocation6]
    $region9: #{my_neural_net.1} parent=1 // pred_fallthru
      _
    // Predicated region
    $region10: #{my_neural_net.1} parent=1 // pred_check
      _
    $region11: #{my_neural_net.1} parent=1 // pred_check_branch
      %32 = sbr.rel (0) target = $region13
    $region12: #{my_neural_net.1} parent=1 // pred_region
      %34 = vsyncadd [#allocation6], 0
      %s36 = sshll.u32 %s2, 4
      %s37 = int_to_ptr.vmem [resolvable:$true] %s36
      %39 = dma.vmem_to_smem %s37, 16, [#allocation7], [#allocation6]
    $region13: #{my_neural_net.1} parent=1 // pred_fallthru
      _
    // Predicated region
    $region14: #{my_neural_net.1} parent=1 // pred_check
      _
    $region15: #{my_neural_net.1} parent=1 // pred_check_branch
      %41 = sbr.rel (0) target = $region17
    $region16: #{my_neural_net.1} parent=1 // pred_region
      _
    $region17: #{my_neural_net.1} parent=1 // pred_fallthru
      _
    // Predicated region
    $region18: #{my_neural_net.1} parent=1 // pred_check
      _
    $region19: #{my_neural_net.1} parent=1 // pred_check_branch
      %43 = sbr.rel (0) target = $region21
    $region20: #{my_neural_net.1} parent=1 // pred_region
      _
    $region21: #{my_neural_net.1} parent=1 // pred_fallthru
      _
    // Predicated region
    $region22: #{my_neural_net.1} parent=1 // pred_check
      _
    $region23: #{my_neural_net.1} parent=1 // pred_check_branch
      %45 = sbr.rel (0) target = $region25
    $region24: #{my_neural_net.1} parent=1 // pred_region
      %47 = dma.done [#allocation4], 32
    $region25: #{my_neural_net.1} parent=1 // pred_fallthru
      _
    // Predicated region
    $region26: #{my_neural_net.1} parent=1 // pred_check
      _
    $region27: #{my_neural_net.1} parent=1 // pred_check_branch
      %49 = sbr.rel (0) target = $region29
    $region28: #{my_neural_net.1} parent=1 // pred_region
      %51 = dma.done [#allocation6], 16
    $region29: #{my_neural_net.1} parent=1 // pred_fallthru
      _
    // Predicated region
    $region30: #{my_neural_net.1} parent=1 // pred_check
      _
    $region31: #{my_neural_net.1} parent=1 // pred_check_branch
      %53 = sbr.rel (0) target = $region33
    $region32: #{my_neural_net.1} parent=1 // pred_region
      %55 = dma.done [#allocation6], 16
    $region33: #{my_neural_net.1} parent=1 // pred_fallthru
      _
    %56 = sfence
    %v57 = vld [vmem:[%s4] sm:$0xff]
    %v58 = vld [vmem:[%s4 + $0x8] sm:$0xff]
    %v59 = vld [vmem:[%s4 + $0x10] sm:$0xff]
    %v60 = vld [vmem:[%s4 + $0x18] sm:$0xff]
    %s61 = scalar_lea.vmem %s4, 32
    %v62 = vld [vmem:[%s61] sm:$0xff]
    %v63 = vld [vmem:[%s61 + $0x8] sm:$0xff]
    %v64 = vld [vmem:[%s61 + $0x10] sm:$0xff]
    %v65 = vld [vmem:[%s61 + $0x18] sm:$0xff]
    %s66 = sld [smem:[#allocation3]]
    %v67 = vstv %s66
    %v68 = vmul.f32 %v57, %v67
    %v69 = vmul.f32 %v58, %v67
    %v70 = vmul.f32 %v59, %v67
    %v71 = vmul.f32 %v60, %v67
    %s72 = sld [smem:[#allocation3 + $0x80]]
    %v73 = vstv %s72
    %v74 = vmul.f32 %v62, %v73
    %v75 = vmul.f32 %v63, %v73
    %v76 = vmul.f32 %v64, %v73
    %v77 = vmul.f32 %v65, %v73
    %s78 = sld [smem:[#allocation5]]
    %v79 = vstv %s78
    %v80 = vadd.f32 %v74, %v79
    %v81 = vadd.f32 %v75, %v79
    %v82 = vadd.f32 %v76, %v79
    %v83 = vadd.f32 %v77, %v79
    %v84 = vadd.f32 %v68, %v80
    %v85 = vadd.f32 %v69, %v81
    %v86 = vadd.f32 %v70, %v82
    %v87 = vadd.f32 %v71, %v83
    %v88 = vmax.f32 %v84, 0.0
    %v89 = vmax.f32 %v85, 0.0
    %v90 = vmax.f32 %v86, 0.0
    %v91 = vmax.f32 %v87, 0.0
    %s92 = sld [smem:[#allocation7]]
    %v93 = vstv %s92
    %v94 = vmul.f32 %v88, %v93
    %v95 = vmul.f32 %v89, %v93
    %v96 = vmul.f32 %v90, %v93
    %v97 = vmul.f32 %v91, %v93
    %s98 = sld [smem:[#allocation3 + $0x1]]
    %v99 = vstv %s98
    %v100 = vmul.f32 %v57, %v99
    %v101 = vmul.f32 %v58, %v99
    %v102 = vmul.f32 %v59, %v99
    %v103 = vmul.f32 %v60, %v99
    %s104 = sld [smem:[#allocation3 + $0x81]]
    %v105 = vstv %s104
    %v106 = vmul.f32 %v62, %v105
    %v107 = vmul.f32 %v63, %v105
    %v108 = vmul.f32 %v64, %v105
    %v109 = vmul.f32 %v65, %v105
    %s110 = sld [smem:[#allocation5 + $0x1]]
    %v111 = vstv %s110
    %v112 = vadd.f32 %v106, %v111
    %v113 = vadd.f32 %v107, %v111
    %v114 = vadd.f32 %v108, %v111
    %v115 = vadd.f32 %v109, %v111
    %v116 = vadd.f32 %v100, %v112
    %v117 = vadd.f32 %v101, %v113
    %v118 = vadd.f32 %v102, %v114
    %v119 = vadd.f32 %v103, %v115
    %v120 = vmax.f32 %v116, 0.0
    %v121 = vmax.f32 %v117, 0.0
    %v122 = vmax.f32 %v118, 0.0
    %v123 = vmax.f32 %v119, 0.0
    %s124 = sld [smem:[#allocation7 + $0x1]]
    %v125 = vstv %s124
    %v126 = vmul.f32 %v120, %v125
    %v127 = vmul.f32 %v121, %v125
    %v128 = vmul.f32 %v122, %v125
    %v129 = vmul.f32 %v123, %v125
    %s130 = sld [smem:[#allocation3 + $0x2]]
    %v131 = vstv %s130
    %v132 = vmul.f32 %v57, %v131
    %v133 = vmul.f32 %v58, %v131
    %v134 = vmul.f32 %v59, %v131
    %v135 = vmul.f32 %v60, %v131
    %s136 = sld [smem:[#allocation3 + $0x82]]
    %v137 = vstv %s136
    %v138 = vmul.f32 %v62, %v137
    %v139 = vmul.f32 %v63, %v137
    %v140 = vmul.f32 %v64, %v137
    %v141 = vmul.f32 %v65, %v137
    %s142 = sld [smem:[#allocation5 + $0x2]]
    %v143 = vstv %s142
    %v144 = vadd.f32 %v138, %v143
    %v145 = vadd.f32 %v139, %v143
    %v146 = vadd.f32 %v140, %v143
    %v147 = vadd.f32 %v141, %v143
    %v148 = vadd.f32 %v132, %v144
    %v149 = vadd.f32 %v133, %v145
    %v150 = vadd.f32 %v134, %v146
    %v151 = vadd.f32 %v135, %v147
    %v152 = vmax.f32 %v148, 0.0
    %v153 = vmax.f32 %v149, 0.0
    %v154 = vmax.f32 %v150, 0.0
    %v155 = vmax.f32 %v151, 0.0
    %s156 = sld [smem:[#allocation7 + $0x2]]
    %v157 = vstv %s156
    %v158 = vmul.f32 %v152, %v157
    %v159 = vmul.f32 %v153, %v157
    %v160 = vmul.f32 %v154, %v157
    %v161 = vmul.f32 %v155, %v157
    %s162 = sld [smem:[#allocation3 + $0x3]]
    %v163 = vstv %s162
    %v164 = vmul.f32 %v57, %v163
    %v165 = vmul.f32 %v58, %v163
    %v166 = vmul.f32 %v59, %v163
    %v167 = vmul.f32 %v60, %v163
    %s168 = sld [smem:[#allocation3 + $0x83]]
    %v169 = vstv %s168
    %v170 = vmul.f32 %v62, %v169
    %v171 = vmul.f32 %v63, %v169
    %v172 = vmul.f32 %v64, %v169
    %v173 = vmul.f32 %v65, %v169
    %s174 = sld [smem:[#allocation5 + $0x3]]
    %v175 = vstv %s174
    %v176 = vadd.f32 %v170, %v175
    %v177 = vadd.f32 %v171, %v175
    %v178 = vadd.f32 %v172, %v175
    %v179 = vadd.f32 %v173, %v175
    %v180 = vadd.f32 %v164, %v176
    %v181 = vadd.f32 %v165, %v177
    %v182 = vadd.f32 %v166, %v178
    %v183 = vadd.f32 %v167, %v179
    %v184 = vmax.f32 %v180, 0.0
    %v185 = vmax.f32 %v181, 0.0
    %v186 = vmax.f32 %v182, 0.0
    %v187 = vmax.f32 %v183, 0.0
    %s188 = sld [smem:[#allocation7 + $0x3]]
    %v189 = vstv %s188
    %v190 = vmul.f32 %v184, %v189
    %v191 = vmul.f32 %v185, %v189
    %v192 = vmul.f32 %v186, %v189
    %v193 = vmul.f32 %v187, %v189
    %s194 = sld [smem:[#allocation3 + $0x4]]
    %v195 = vstv %s194
    %v196 = vmul.f32 %v57, %v195
    %v197 = vmul.f32 %v58, %v195
    %v198 = vmul.f32 %v59, %v195
    %v199 = vmul.f32 %v60, %v195
    %s200 = sld [smem:[#allocation3 + $0x84]]
    %v201 = vstv %s200
    %v202 = vmul.f32 %v62, %v201
    %v203 = vmul.f32 %v63, %v201
    %v204 = vmul.f32 %v64, %v201
    %v205 = vmul.f32 %v65, %v201
    %s206 = sld [smem:[#allocation5 + $0x4]]
    %v207 = vstv %s206
    %v208 = vadd.f32 %v202, %v207
    %v209 = vadd.f32 %v203, %v207
    %v210 = vadd.f32 %v204, %v207
    %v211 = vadd.f32 %v205, %v207
    %v212 = vadd.f32 %v196, %v208
    %v213 = vadd.f32 %v197, %v209
    %v214 = vadd.f32 %v198, %v210
    %v215 = vadd.f32 %v199, %v211
    %v216 = vmax.f32 %v212, 0.0
    %v217 = vmax.f32 %v213, 0.0
    %v218 = vmax.f32 %v214, 0.0
    %v219 = vmax.f32 %v215, 0.0
    %s220 = sld [smem:[#allocation7 + $0x4]]
    %v221 = vstv %s220
    %v222 = vmul.f32 %v216, %v221
    %v223 = vmul.f32 %v217, %v221
    %v224 = vmul.f32 %v218, %v221
    %v225 = vmul.f32 %v219, %v221
    %s226 = sld [smem:[#allocation3 + $0x5]]
    %v227 = vstv %s226
    %v228 = vmul.f32 %v57, %v227
    %v229 = vmul.f32 %v58, %v227
    %v230 = vmul.f32 %v59, %v227
    %v231 = vmul.f32 %v60, %v227
    %s232 = sld [smem:[#allocation3 + $0x85]]
    %v233 = vstv %s232
    %v234 = vmul.f32 %v62, %v233
    %v235 = vmul.f32 %v63, %v233
    %v236 = vmul.f32 %v64, %v233
    %v237 = vmul.f32 %v65, %v233
    %s238 = sld [smem:[#allocation5 + $0x5]]
    %v239 = vstv %s238
    %v240 = vadd.f32 %v234, %v239
    %v241 = vadd.f32 %v235, %v239
    %v242 = vadd.f32 %v236, %v239
    %v243 = vadd.f32 %v237, %v239
    %v244 = vadd.f32 %v228, %v240
    %v245 = vadd.f32 %v229, %v241
    %v246 = vadd.f32 %v230, %v242
    %v247 = vadd.f32 %v231, %v243
    %v248 = vmax.f32 %v244, 0.0
    %v249 = vmax.f32 %v245, 0.0
    %v250 = vmax.f32 %v246, 0.0
    %v251 = vmax.f32 %v247, 0.0
    %s252 = sld [smem:[#allocation7 + $0x5]]
    %v253 = vstv %s252
    %v254 = vmul.f32 %v248, %v253
    %v255 = vmul.f32 %v249, %v253
    %v256 = vmul.f32 %v250, %v253
    %v257 = vmul.f32 %v251, %v253
    %s258 = sld [smem:[#allocation3 + $0x6]]
    %v259 = vstv %s258
    %v260 = vmul.f32 %v57, %v259
    %v261 = vmul.f32 %v58, %v259
    %v262 = vmul.f32 %v59, %v259
    %v263 = vmul.f32 %v60, %v259
    %s264 = sld [smem:[#allocation3 + $0x86]]
    %v265 = vstv %s264
    %v266 = vmul.f32 %v62, %v265
    %v267 = vmul.f32 %v63, %v265
    %v268 = vmul.f32 %v64, %v265
    %v269 = vmul.f32 %v65, %v265
    %s270 = sld [smem:[#allocation5 + $0x6]]
    %v271 = vstv %s270
    %v272 = vadd.f32 %v266, %v271
    %v273 = vadd.f32 %v267, %v271
    %v274 = vadd.f32 %v268, %v271
    %v275 = vadd.f32 %v269, %v271
    %v276 = vadd.f32 %v260, %v272
    %v277 = vadd.f32 %v261, %v273
    %v278 = vadd.f32 %v262, %v274
    %v279 = vadd.f32 %v263, %v275
    %v280 = vmax.f32 %v276, 0.0
    %v281 = vmax.f32 %v277, 0.0
    %v282 = vmax.f32 %v278, 0.0
    %v283 = vmax.f32 %v279, 0.0
    %s284 = sld [smem:[#allocation7 + $0x6]]
    %v285 = vstv %s284
    %v286 = vmul.f32 %v280, %v285
    %v287 = vmul.f32 %v281, %v285
    %v288 = vmul.f32 %v282, %v285
    %v289 = vmul.f32 %v283, %v285
    %s290 = sld [smem:[#allocation3 + $0x7]]
    %v291 = vstv %s290
    %v292 = vmul.f32 %v57, %v291
    %v293 = vmul.f32 %v58, %v291
    %v294 = vmul.f32 %v59, %v291
    %v295 = vmul.f32 %v60, %v291
    %s296 = sld [smem:[#allocation3 + $0x87]]
    %v297 = vstv %s296
    %v298 = vmul.f32 %v62, %v297
    %v299 = vmul.f32 %v63, %v297
    %v300 = vmul.f32 %v64, %v297
    %v301 = vmul.f32 %v65, %v297
    %s302 = sld [smem:[#allocation5 + $0x7]]
    %v303 = vstv %s302
    %v304 = vadd.f32 %v298, %v303
    %v305 = vadd.f32 %v299, %v303
    %v306 = vadd.f32 %v300, %v303
    %v307 = vadd.f32 %v301, %v303
    %v308 = vadd.f32 %v292, %v304
    %v309 = vadd.f32 %v293, %v305
    %v310 = vadd.f32 %v294, %v306
    %v311 = vadd.f32 %v295, %v307
    %v312 = vmax.f32 %v308, 0.0
    %v313 = vmax.f32 %v309, 0.0
    %v314 = vmax.f32 %v310, 0.0
    %v315 = vmax.f32 %v311, 0.0
    %s316 = sld [smem:[#allocation7 + $0x7]]
    %v317 = vstv %s316
    %v318 = vmul.f32 %v312, %v317
    %v319 = vmul.f32 %v313, %v317
    %v320 = vmul.f32 %v314, %v317
    %v321 = vmul.f32 %v315, %v317
    %v322 = vadd.f32 %v94, %v126
    %v323 = vadd.f32 %v95, %v127
    %v324 = vadd.f32 %v96, %v128
    %v325 = vadd.f32 %v97, %v129
    %v326 = vadd.f32 %v158, %v190
    %v327 = vadd.f32 %v159, %v191
    %v328 = vadd.f32 %v160, %v192
    %v329 = vadd.f32 %v161, %v193
    %v330 = vadd.f32 %v222, %v254
    %v331 = vadd.f32 %v223, %v255
    %v332 = vadd.f32 %v224, %v256
    %v333 = vadd.f32 %v225, %v257
    %v334 = vadd.f32 %v286, %v318
    %v335 = vadd.f32 %v287, %v319
    %v336 = vadd.f32 %v288, %v320
    %v337 = vadd.f32 %v289, %v321
    %v338 = vadd.f32 %v322, %v326
    %v339 = vadd.f32 %v323, %v327
    %v340 = vadd.f32 %v324, %v328
    %v341 = vadd.f32 %v325, %v329
    %v342 = vadd.f32 %v330, %v334
    %v343 = vadd.f32 %v331, %v335
    %v344 = vadd.f32 %v332, %v336
    %v345 = vadd.f32 %v333, %v337
    %v346 = vadd.f32 %v338, %v342
    %v347 = vadd.f32 %v339, %v343
    %v348 = vadd.f32 %v340, %v344
    %v349 = vadd.f32 %v341, %v345
    %s350 = sld [smem:[#allocation2]]
    %v351 = vstv %s350
    %v352 = vadd.f32 %v346, %v351
    %v353 = vadd.f32 %v347, %v351
    %v354 = vadd.f32 %v348, %v351
    %v355 = vadd.f32 %v349, %v351
    %356 = vst [vmem:[%s5] sm:$0xff] %v352
    %357 = vst [vmem:[%s5 + $0x8] sm:$0xff] %v353
    %358 = vst [vmem:[%s5 + $0x10] sm:$0xff] %v354
    %359 = vst [vmem:[%s5 + $0x18] sm:$0xff] %v355
    // Predicated region
    $region34: #{my_neural_net.1} parent=1 // pred_check
      _
    $region35: #{my_neural_net.1} parent=1 // pred_check_branch
      %361 = sbr.rel (0) target = $region37
    $region36: #{my_neural_net.1} parent=1 // pred_region
      _
    $region37: #{my_neural_net.1} parent=1 // pred_fallthru
      _
    // Predicated region
    $region38: #{my_neural_net.1} parent=1 // pred_check
      _
    $region39: #{my_neural_net.1} parent=1 // pred_check_branch
      %363 = sbr.rel (0) target = $region41
    $region40: #{my_neural_net.1} parent=1 // pred_region
      _
    $region41: #{my_neural_net.1} parent=1 // pred_fallthru
      _
    %364 = vsyncpa [#allocation4], 1
    %365 = vsyncpa [#allocation6], 1

</llo_original>
